<compile_context>
chip_gen: v6e
topology: v6e:2x2x1
jax: 0.10.0
libtpu: 0.0.40
codegen_flags: <defaults>
</compile_context>

<pallas_src>
import jax
import jax.numpy as jnp
from jax.experimental import pallas as pl
from jax.experimental.pallas import tpu as pltpu

LN_EPS = 1e-5  # torch.nn.LayerNorm default


def _round_up(x, m):
    return ((x + m - 1) // m) * m


def _sublane_pack(dtype):
    # Rows per packed sublane group: 8 for f32, 16 for bf16, 32 for int8/fp8.
    return max(8, 32 // jnp.dtype(dtype).itemsize)


def _vmem_capacity_bytes():
    try:
        return int(pltpu.get_tpu_info().vmem_capacity_bytes)
    except Exception:  # pragma: no cover - fallback if query unavailable
        return 64 << 20  # conservative: v7x per-TensorCore VMEM


# -----------------------------------------------------------------------------
# One-time parameter transform (hoisted out of the per-call path):
#   LayerNorm(gamma, beta) followed by Linear(W, b) is exactly
#     y = normalize(x) @ (diag(gamma) @ W) + (beta @ W + b)
# so the kernel only has to normalize and hit the MXU.  Dout is padded to a
# lane-dense multiple of 128 here, once, so kernel output stores are unmasked.
# -----------------------------------------------------------------------------
def fold_prenorm_linear_params(gamma, beta, w, wb, *, param_dtype=None):
    D, Dout = w.shape
    dt = param_dtype or w.dtype
    w32 = w.astype(jnp.float32)
    w_fused = (gamma.astype(jnp.float32)[:, None] * w32).astype(dt)
    b_fused = (beta.astype(jnp.float32) @ w32
               + wb.astype(jnp.float32)).reshape(1, Dout).astype(jnp.float32)
    Dout_p = _round_up(Dout, 128)
    if Dout_p != Dout:
        w_fused = jnp.pad(w_fused, ((0, 0), (0, Dout_p - Dout)))
        b_fused = jnp.pad(b_fused, ((0, 0), (0, Dout_p - Dout)))
    return w_fused, b_fused, Dout


# -----------------------------------------------------------------------------
# Kernels
# -----------------------------------------------------------------------------
def _prenorm_resident_kernel(x_ref, w_ref, b_ref, o_ref):
    # Weight fully VMEM-resident: one LN + one (tm,D)@(D,Dout_p) matmul per
    # row tile, no Dout grid axis, no scratch, no pl.when bubble.
    x = x_ref[...].astype(jnp.float32)
    # One-pass stats (mean and E[x^2] -> var).  Fine for activation-scale
    # inputs; use the two-pass form if inputs can be enormous in magnitude.
    mean = jnp.mean(x, axis=-1, keepdims=True)
    ex2 = jnp.mean(x * x, axis=-1, keepdims=True)
    var = jnp.maximum(ex2 - mean * mean, 0.0)
    inv = jax.lax.rsqrt(var + LN_EPS)
    xn = ((x - mean) * inv).astype(w_ref.dtype)
    out = jnp.dot(xn, w_ref[...], preferred_element_type=jnp.float32)
    o_ref[...] = (out + b_ref[...].astype(jnp.float32)).astype(o_ref.dtype)


def _prenorm_tiled_kernel(x_ref, w_ref, b_ref, o_ref, xn_ref):
    # Fallback when the fused weight cannot be VMEM-resident: Dout tiled on
    # grid axis 1.  LN stats are computed once per row tile (at j == 0) and
    # the normalized rows are cached in VMEM scratch for every column tile.
    # NOTE: correctness of xn_ref relies on axis 1 being the innermost,
    # sequentially iterated ("arbitrary") axis -- do not reorder the grid.
    j = pl.program_id(1)

    @pl.when(j == 0)
    def _():
        x = x_ref[...].astype(jnp.float32)
        mean = jnp.mean(x, axis=-1, keepdims=True)
        ex2 = jnp.mean(x * x, axis=-1, keepdims=True)
        var = jnp.maximum(ex2 - mean * mean, 0.0)
        inv = jax.lax.rsqrt(var + LN_EPS)
        xn_ref[...] = ((x - mean) * inv).astype(xn_ref.dtype)

    out = jnp.dot(xn_ref[...], w_ref[...], preferred_element_type=jnp.float32)
    o_ref[...] = (out + b_ref[...].astype(jnp.float32)).astype(o_ref.dtype)


# -----------------------------------------------------------------------------
# Wrapper
# -----------------------------------------------------------------------------
def prenorm_linear(x, w_fused, b_fused, dout, *, row_block=1024, col_block=512,
                   max_resident_weight_bytes=None):
    """PreNorm with fn = Linear, on pre-folded params.

    x: [B, N, D]; w_fused: [D, Dout_p]; b_fused: [1, Dout_p] (both already
    gamma/beta-folded and lane-padded by fold_prenorm_linear_params).
    Returns [B, N, dout].
    """
    B, N, D = x.shape
    Dout_p = w_fused.shape[1]
    rows = B * N

    x_sz = jnp.dtype(x.dtype).itemsize
    w_sz = jnp.dtype(w_fused.dtype).itemsize
    o_sz = x_sz
    pack = _sublane_pack(x.dtype)

    vmem_cap = _vmem_capacity_bytes()
    vmem_budget = int(0.8 * vmem_cap)  # generation-aware (64 MiB on v7x)

    # Resident-weight path gating: generous on v5e/v6e (128 MiB VMEM),
    # conservative on v7x (64 MiB).
    weight_bytes = D * Dout_p * w_sz
    if max_resident_weight_bytes is None:
        max_resident_weight_bytes = min(16 << 20, vmem_cap // 4)
    resident = weight_bytes <= max_resident_weight_bytes

    # ---- choose the row tile tm:
    #  * as large as row_block allows (keeps the kernel MXU-bound instead of
    #    weight-stream bound when the weight is not resident),
    #  * multiple of the dtype's sublane pack,
    #  * dividing rows when practical (avoids a pad copy of the activations),
    #  * >= 2 blocks on the "parallel" row axis so both v7x TensorCores work,
    #  * double-buffered working set fits the VMEM budget.
    tm = max(pack, min(row_block, _round_up(rows, pack)))
    tm = _round_up(tm, pack)
    if rows % tm != 0:
        for cand in range(tm, pack - 1, -pack):
            if rows % cand == 0 and cand * 4 >= tm:
                tm = cand
                break
    if _round_up(rows, tm) // tm < 2 and rows > pack:
        tm = max(pack, _round_up((rows + 1) // 2, pack))

    tn = min(col_block, Dout_p)  # only used on the tiled path

    def _vmem_est(tm_):
        if resident:
            return (2 * tm_ * D * x_sz        # x double-buffer
                    + 2 * weight_bytes        # resident weight (dbl-buffered)
                    + 2 * Dout_p * 4          # resident bias (f32)
                    + 2 * tm_ * Dout_p * o_sz)  # output double-buffer
        return (2 * tm_ * D * x_sz + 2 * D * tn * w_sz + 2 * tn * 4
                + 2 * tm_ * tn * o_sz + tm_ * D * w_sz)  # + xn scratch

    while tm > pack and _vmem_est(tm) > vmem_budget:
        tm = max(pack, _round_up(tm // 2, pack))

    rows_p = _round_up(rows, tm)
    x2 = x.reshape(rows, D)
    if rows_p != rows:
        # TODO(synk): a ragged final tile / masked store would avoid this pad
        # copy; it only triggers when no pack-aligned tm divides rows.
        x2 = jnp.pad(x2, ((0, rows_p - rows), (0, 0)))

    vmem_limit = min(int(_vmem_est(tm) * 1.5) + (4 << 20), vmem_budget)
    n_row_blocks = rows_p // tm

    if resident:
        cost = pl.CostEstimate(
            flops=2 * rows_p * D * Dout_p,
            transcendentals=0,
            bytes_accessed=(rows_p * D * x_sz + weight_bytes + Dout_p * 4
                            + rows_p * Dout_p * o_sz))
        out2 = pl.pallas_call(
            _prenorm_resident_kernel,
            out_shape=jax.ShapeDtypeStruct((rows_p, Dout_p), x.dtype),
            grid_spec=pltpu.PrefetchScalarGridSpec(
                num_scalar_prefetch=0,
                grid=(n_row_blocks,),
                in_specs=[
                    pl.BlockSpec((tm, D), lambda i: (i, 0)),      # x row tile
                    pl.BlockSpec((D, Dout_p), lambda i: (0, 0)),  # resident W'
                    pl.BlockSpec((1, Dout_p), lambda i: (0, 0)),  # resident b'
                ],
                out_specs=pl.BlockSpec((tm, Dout_p), lambda i: (i, 0)),
            ),
            compiler_params=pltpu.CompilerParams(
                dimension_semantics=("parallel",),
                vmem_limit_bytes=vmem_limit,
            ),
            cost_estimate=cost,
        )(x2, w_fused, b_fused)
    else:
        Dout_pp = _round_up(Dout_p, tn)
        if Dout_pp != Dout_p:
            w_fused = jnp.pad(w_fused, ((0, 0), (0, Dout_pp - Dout_p)))
            b_fused = jnp.pad(b_fused, ((0, 0), (0, Dout_pp - Dout_p)))
            Dout_p = Dout_pp
        cost = pl.CostEstimate(
            flops=2 * rows_p * D * Dout_p,
            transcendentals=0,
            bytes_accessed=(rows_p * D * x_sz
                            + n_row_blocks * D * Dout_p * w_sz  # W re-streamed
                            + Dout_p * 4 + rows_p * Dout_p * o_sz))
        out2 = pl.pallas_call(
            _prenorm_tiled_kernel,
            out_shape=jax.ShapeDtypeStruct((rows_p, Dout_p), x.dtype),
            grid_spec=pltpu.PrefetchScalarGridSpec(
                num_scalar_prefetch=0,
                grid=(n_row_blocks, Dout_p // tn),
                in_specs=[
                    pl.BlockSpec((tm, D), lambda i, j: (i, 0)),   # x row tile
                    pl.BlockSpec((D, tn), lambda i, j: (0, j)),   # weight tile
                    pl.BlockSpec((1, tn), lambda i, j: (0, j)),   # bias tile
                ],
                out_specs=pl.BlockSpec((tm, tn), lambda i, j: (i, j)),
                scratch_shapes=[pltpu.VMEM((tm, D), w_fused.dtype)],
            ),
            compiler_params=pltpu.CompilerParams(
                # Row axis shards across TensorCores; the Dout axis must stay
                # the innermost sequential axis (xn scratch reused across j).
                dimension_semantics=("parallel", "arbitrary"),
                vmem_limit_bytes=vmem_limit,
            ),
            cost_estimate=cost,
        )(x2, w_fused, b_fused)

    return out2[:rows, :dout].reshape(B, N, dout)


def _reference(x, gamma, beta, w, wb):
    xf = x.astype(jnp.float32)
    mean = jnp.mean(xf, axis=-1, keepdims=True)
    var = jnp.mean((xf - mean) ** 2, axis=-1, keepdims=True)
    xn = (xf - mean) / jnp.sqrt(var + LN_EPS)
    y = xn * gamma.astype(jnp.float32) + beta.astype(jnp.float32)
    return (y @ w.astype(jnp.float32) + wb.astype(jnp.float32)).astype(x.dtype)


if __name__ == "__main__":
    key = jax.random.PRNGKey(0)
    kx, kg, kb, kw, kwb = jax.random.split(key, 5)

    D = 32          # hidden dim
    Dout = 32       # fn = Linear(dim, dim)

    # LayerNorm params (dim,)
    gamma = jax.random.normal(kg, (D,), dtype=jnp.float32) * 0.1 + 1.0
    beta = jax.random.normal(kb, (D,), dtype=jnp.float32) * 0.1
    # fn = Linear(dim, dim) params
    w = jax.random.normal(kw, (D, Dout), dtype=jnp.float32) * (1.0 / jnp.sqrt(D))
    wb = jax.random.normal(kwb, (Dout,), dtype=jnp.float32) * 0.1

    # One-time parameter fold (hoisted out of the per-call path).
    w_fused, b_fused, dout = fold_prenorm_linear_params(gamma, beta, w, wb)
    w_fused = jax.block_until_ready(w_fused)
    b_fused = jax.block_until_ready(b_fused)

    # Test 1: resident-weight fast path (batch=2, seq=8, hidden=32).
    B, N = 2, 8
    x = jax.random.normal(kx, (B, N, D), dtype=jnp.float32)
    out = jax.block_until_ready(prenorm_linear(x, w_fused, b_fused, dout))
    ref = _reference(x, gamma, beta, w, wb)
    assert out.shape == (B, N, Dout), out.shape
    assert jnp.allclose(out, ref, atol=1e-4, rtol=1e-4), \
        float(jnp.max(jnp.abs(out - ref)))

    # Test 2: ragged row count (exercises the row-padding path).
    B2, N2 = 1, 5
    x2 = jax.random.normal(kx, (B2, N2, D), dtype=jnp.float32)
    out2 = jax.block_until_ready(prenorm_linear(x2, w_fused, b_fused, dout))
    ref2 = _reference(x2, gamma, beta, w, wb)
    assert out2.shape == (B2, N2, Dout), out2.shape
    assert jnp.allclose(out2, ref2, atol=1e-4, rtol=1e-4), \
        float(jnp.max(jnp.abs(out2 - ref2)))

    # Test 3: force the tiled (Dout-on-grid) fallback used when the fused
    # weight is too large to be VMEM-resident.
    out3 = jax.block_until_ready(
        prenorm_linear(x, w_fused, b_fused, dout, max_resident_weight_bytes=0))
    assert jnp.allclose(out3, ref, atol=1e-4, rtol=1e-4), \
        float(jnp.max(jnp.abs(out3 - ref)))

    print("KERNEL_OK")
</pallas_src>

<mosaic_0001>
module attributes {stable_mosaic.version = 11 : i64} {
  func.func @_prenorm_resident_kernel(%arg0: i32, %arg1: memref<8x32xf32, #tpu.memory_space<vmem>>, %arg2: memref<32x128xf32, #tpu.memory_space<vmem>>, %arg3: memref<1x128xf32, #tpu.memory_space<vmem>>, %arg4: memref<8x128xf32, #tpu.memory_space<vmem>>) attributes {dimension_semantics = [#tpu.dimension_semantics<parallel>], iteration_bounds = array<i64: 2>, scalar_prefetch = 0 : i64, scratch_operands = 0 : i64, tpu.core_type = #tpu.core_type<tc>, window_params = [{transform_indices = @transform_0, window_bounds = array<i64: 8, 32>}, {pipeline_mode = #tpu.pipeline_mode<synchronous>, transform_indices = @transform_1, window_bounds = array<i64: 32, 128>}, {pipeline_mode = #tpu.pipeline_mode<synchronous>, transform_indices = @transform_2, window_bounds = array<i64: 1, 128>}, {transform_indices = @transform_3, window_bounds = array<i64: 8, 128>}]} {
    %c0 = arith.constant 0 : index
    %c0_0 = arith.constant 0 : index
    %0 = vector.load %arg1[%c0, %c0_0] : memref<8x32xf32, #tpu.memory_space<vmem>>, vector<8x32xf32>
    %cst = arith.constant dense<0.000000e+00> : vector<8xf32>
    %1 = vector.multi_reduction <add>, %0, %cst [1] : vector<8x32xf32> to vector<8xf32>
    %2 = vector.shape_cast %1 : vector<8xf32> to vector<8x1xf32>
    %cst_1 = arith.constant 3.200000e+01 : f32
    %3 = vector.broadcast %cst_1 : f32 to vector<8x1xf32>
    %4 = arith.divf %2, %3 : vector<8x1xf32>
    %5 = arith.mulf %0, %0 : vector<8x32xf32>
    %cst_2 = arith.constant dense<0.000000e+00> : vector<8xf32>
    %6 = vector.multi_reduction <add>, %5, %cst_2 [1] : vector<8x32xf32> to vector<8xf32>
    %7 = vector.shape_cast %6 : vector<8xf32> to vector<8x1xf32>
    %cst_3 = arith.constant 3.200000e+01 : f32
    %8 = vector.broadcast %cst_3 : f32 to vector<8x1xf32>
    %9 = arith.divf %7, %8 : vector<8x1xf32>
    %10 = arith.mulf %4, %4 : vector<8x1xf32>
    %11 = arith.subf %9, %10 : vector<8x1xf32>
    %cst_4 = arith.constant 0.000000e+00 : f32
    %12 = vector.broadcast %cst_4 : f32 to vector<8x1xf32>
    %13 = arith.maximumf %11, %12 : vector<8x1xf32>
    %cst_5 = arith.constant 9.99999974E-6 : f32
    %14 = vector.broadcast %cst_5 : f32 to vector<8x1xf32>
    %15 = arith.addf %13, %14 : vector<8x1xf32>
    %16 = math.rsqrt %15 : vector<8x1xf32>
    %17 = vector.broadcast %4 : vector<8x1xf32> to vector<8x32xf32>
    %18 = arith.subf %0, %17 : vector<8x32xf32>
    %19 = vector.broadcast %16 : vector<8x1xf32> to vector<8x32xf32>
    %20 = arith.mulf %18, %19 : vector<8x32xf32>
    %c0_6 = arith.constant 0 : index
    %c0_7 = arith.constant 0 : index
    %21 = vector.load %arg2[%c0_6, %c0_7] : memref<32x128xf32, #tpu.memory_space<vmem>>, vector<32x128xf32>
    %cst_8 = arith.constant dense<0.000000e+00> : vector<8x128xf32>
    %22 = tpu.matmul %20, %21, %cst_8 {dimension_numbers = #tpu.dot_dimension_numbers<[1], [0], [0], [1], [0, 0, 1, 1], [], []>} : vector<8x32xf32>, vector<32x128xf32>, vector<8x128xf32> -> vector<8x128xf32>
    %c0_9 = arith.constant 0 : index
    %c0_10 = arith.constant 0 : index
    %23 = vector.load %arg3[%c0_9, %c0_10] : memref<1x128xf32, #tpu.memory_space<vmem>>, vector<1x128xf32>
    %24 = vector.broadcast %23 : vector<1x128xf32> to vector<8x128xf32>
    %25 = arith.addf %22, %24 : vector<8x128xf32>
    %c0_11 = arith.constant 0 : index
    %c0_12 = arith.constant 0 : index
    %26 = vector.load %arg4[%c0_11, %c0_12] : memref<8x128xf32, #tpu.memory_space<vmem>>, vector<8x128xf32>
    tpu.vector_store %arg4[%c0_11, %c0_12], %25 {strides = array<i32>} : memref<8x128xf32, #tpu.memory_space<vmem>>, vector<8x128xf32>,
    return
  }
  func.func @transform_0(%arg0: i32) -> (i32, i32) {
    %c0_i32 = arith.constant 0 : i32
    %c0_i32_0 = arith.constant 0 : i32
    return %arg0, %c0_i32 : i32, i32
  }
  func.func @transform_1(%arg0: i32) -> (i32, i32) {
    %c0_i32 = arith.constant 0 : i32
    %c0_i32_0 = arith.constant 0 : i32
    %c0_i32_1 = arith.constant 0 : i32
    return %c0_i32, %c0_i32_0 : i32, i32
  }
  func.func @transform_2(%arg0: i32) -> (i32, i32) {
    %c0_i32 = arith.constant 0 : i32
    %c0_i32_0 = arith.constant 0 : i32
    %c0_i32_1 = arith.constant 0 : i32
    return %c0_i32, %c0_i32_0 : i32, i32
  }
  func.func @transform_3(%arg0: i32) -> (i32, i32) {
    %c0_i32 = arith.constant 0 : i32
    %c0_i32_0 = arith.constant 0 : i32
    return %arg0, %c0_i32 : i32, i32
  }
}

</mosaic_0001>

<llo_original>
// kernel: tpu_custom_call.1
$region0: #{tpu_custom_call.1}
  #allocation0 [shape = 'u32[]', space=smem, size = 0x4, offset = 0x4, fixed_abs, tag = 'smem constant byte address 0x4 - core index']
  #allocation1 [shape = 'u32[144,128]{1,0:T(1,128)}', space=vmem, size = 0x12000, scoped, tag = 'internal scratch']
  %s0 = inlined_call_operand.hbm [shape: f32[16,32], index: 0, kind: input, shape index: {}]
  %s1 = inlined_call_operand.hbm [shape: f32[32,128], index: 1, kind: input, shape index: {}]
  %s2 = inlined_call_operand.vmem [shape: f32[1,128], index: 2, kind: input, shape index: {}]
  %s3 = inlined_call_operand.hbm [shape: f32[16,128], index: 3, kind: output, shape index: {}]
  %s4 = sld [smem:[#allocation0]]
  $region53: #{tpu_custom_call.1} parent=0
    _
  %s6 = ssub.s32 1, %s4
  %s7 = scalar_select 0, %s6, %s4
  $region1: #{tpu_custom_call.1} parent=0
    #allocation2 [shape = 'u8[8192]{0}', space=vmem, size = 0x2000, scoped, tag = 'input window, operand 0']
    #allocation3 [shape = 's32[2]{0}', space=sflag, size = 0x8, scoped, tag = 'scoped memory for tpu_custom_call.1']
    #allocation4 [shape = 's32[2]{0}', space=sflag, size = 0x8, scoped, tag = 'scoped memory for tpu_custom_call.1']
    #allocation5 [shape = 'u8[16384]{0}', space=vmem, size = 0x4000, scoped, tag = 'input window, operand 1, single buffered']
    #allocation6 [shape = 's32[1]{0}', space=sflag, size = 0x4, scoped, tag = 'scoped memory for tpu_custom_call.1']
    #allocation7 [shape = 'u8[8192]{0}', space=vmem, size = 0x2000, scoped, tag = 'output window, operand 0']
    %8 = vsyncpa [#allocation3], 0
    %s9 = scalar_lea.sflag [#allocation3], 1
    %10 = vsyncpa %s9, 0
    %11 = vsyncpa [#allocation6], 0
    %12 = vsyncpa [#allocation4], 0
    %s13 = scalar_lea.sflag [#allocation4], 1
    %14 = vsyncpa %s13, 0
    loop: start=0, step=1, limit=4
    $region2: #{tpu_custom_call.1} parent=1 // loop_pre_header
      _
    $region3: #{tpu_custom_call.1} parent=1 // loop_header
      %s16 = sphi 0, %s20
      %p17 = scmp.ge.s32.totalorder %s16, 4
      %s26 = sphi 0, %s28
      %s29 = sphi 0, %s26
      %s30 = sphi 0, %s29
      %s46 = sphi 0, %s30
      %s50 = sphi 0, %s50
      %s52 = sphi 0, %s50
      %s53 = sphi 0, %s52
      %s67 = sphi 0, %s53
      %s71 = sphi 0, %s71
      %s73 = sphi 0, %s71
      %s74 = sphi 0, %s73
      %s88 = sphi 0, %s74
      %s94 = sphi 0, %s96
      %s97 = sphi 0, %s94
      %s98 = sphi 0, %s97
      %s114 = sphi 0, %s98
    $region4: #{tpu_custom_call.1} parent=1 // loop_header_branch
      %19 = sbr.rel (%p17) target = $region8
    $region5: #{tpu_custom_call.1} parent=1 // loop_body
      %s21 = ssub.s32 %s16, 1
      %s22 = ssub.s32 %s16, 2
      %s23 = sadd.s32 %s16, 1
      %s24 = ssub.s32 %s16, %s23
      %p25 = scmp.eq.s32.totalorder %s24, 0
      %s27 = sadd.s32 %s26, 1
      %s28 = scalar_select %p25, %s26, %s27
      %p31 = pneg %p25
      %p32 = scmp.eq.s32.totalorder %s16, 1
      %p33 = por %p31, %p32
      %p34 = scmp.ne.s32.totalorder %s26, %s29
      %p35 = scmp.eq.s32.totalorder %s16, 0
      %p36 = por %p34, %p35
      %p37 = scmp.ne.s32.totalorder %s26, %s29
      %p38 = scmp.eq.s32.totalorder %s21, 1
      %p39 = por %p37, %p38
      %p40 = scmp.ne.s32.totalorder %s29, %s30
      %p41 = scmp.eq.s32.totalorder %s21, 0
      %p42 = por %p40, %p41
      %p43 = scmp.ne.s32.totalorder %s29, %s30
      %p44 = scmp.eq.s32.totalorder %s22, 1
      %p45 = por %p43, %p44
      %p47 = scmp.ne.s32.totalorder %s30, %s46
      %p48 = scmp.eq.s32.totalorder %s22, 0
      %p49 = por %p47, %p48
      %s51 = sadd.s32 %s50, 1
      %p54 = scmp.eq.s32.totalorder %s16, 1
      %p55 = scmp.ne.s32.totalorder %s50, %s52
      %p56 = scmp.eq.s32.totalorder %s16, 0
      %p57 = por %p55, %p56
      %p58 = scmp.ne.s32.totalorder %s50, %s52
      %p59 = scmp.eq.s32.totalorder %s21, 1
      %p60 = por %p58, %p59
      %p61 = scmp.ne.s32.totalorder %s52, %s53
      %p62 = scmp.eq.s32.totalorder %s21, 0
      %p63 = por %p61, %p62
      %p64 = scmp.ne.s32.totalorder %s52, %s53
      %p65 = scmp.eq.s32.totalorder %s22, 1
      %p66 = por %p64, %p65
      %p68 = scmp.ne.s32.totalorder %s53, %s67
      %p69 = scmp.eq.s32.totalorder %s22, 0
      %p70 = por %p68, %p69
      %s72 = sadd.s32 %s71, 1
      %p75 = scmp.eq.s32.totalorder %s16, 1
      %p76 = scmp.ne.s32.totalorder %s71, %s73
      %p77 = scmp.eq.s32.totalorder %s16, 0
      %p78 = por %p76, %p77
      %p79 = scmp.ne.s32.totalorder %s71, %s73
      %p80 = scmp.eq.s32.totalorder %s21, 1
      %p81 = por %p79, %p80
      %p82 = scmp.ne.s32.totalorder %s73, %s74
      %p83 = scmp.eq.s32.totalorder %s21, 0
      %p84 = por %p82, %p83
      %p85 = scmp.ne.s32.totalorder %s73, %s74
      %p86 = scmp.eq.s32.totalorder %s22, 1
      %p87 = por %p85, %p86
      %p89 = scmp.ne.s32.totalorder %s74, %s88
      %p90 = scmp.eq.s32.totalorder %s22, 0
      %p91 = por %p89, %p90
      %s92 = ssub.s32 %s16, %s23
      %p93 = scmp.eq.s32.totalorder %s92, 0
      %s95 = sadd.s32 %s94, 1
      %s96 = scalar_select %p93, %s94, %s95
      %p99 = pneg %p93
      %p100 = scmp.eq.s32.totalorder %s16, 1
      %p101 = por %p99, %p100
      %p102 = scmp.ne.s32.totalorder %s94, %s97
      %p103 = scmp.eq.s32.totalorder %s16, 0
      %p104 = por %p102, %p103
      %p105 = scmp.ne.s32.totalorder %s94, %s97
      %p106 = scmp.eq.s32.totalorder %s21, 1
      %p107 = por %p105, %p106
      %p108 = scmp.ne.s32.totalorder %s97, %s98
      %p109 = scmp.eq.s32.totalorder %s21, 0
      %p110 = por %p108, %p109
      %p111 = scmp.ne.s32.totalorder %s97, %s98
      %p112 = scmp.eq.s32.totalorder %s22, 1
      %p113 = por %p111, %p112
      %p115 = scmp.ne.s32.totalorder %s98, %s114
      %p116 = scmp.eq.s32.totalorder %s22, 0
      %p117 = por %p115, %p116
      %p118 = scmp.le.s32.totalorder 1, %s16
      %p119 = scmp.lt.s32.totalorder %s16, 3
      %p120 = pnand %p118, %p119
      %p121 = pneg %p120
      // Predicated region
      $region9: #{tpu_custom_call.1} parent=5 // pred_check
        _
      $region10: #{tpu_custom_call.1} parent=5 // pred_check_branch
        %123 = sbr.rel (%p120) target = $region12
      $region11: #{tpu_custom_call.1} parent=5 // pred_region
        %s124 = ssub.s32 %s16, 1
        // Predicated region
        $region13: #{tpu_custom_call.1} parent=11 // pred_check
          %p125 = pneg %p63
        $region14: #{tpu_custom_call.1} parent=11 // pred_check_branch
          %127 = sbr.rel (%p125) target = $region16
        $region15: #{tpu_custom_call.1} parent=11 // pred_region
          %s129 = ssub.s32 512, 512
          %130 = vsyncadd [#allocation6], %s129
          %s131 = sshll.u32 [#allocation5], 4
          %s132 = int_to_ptr.vmem [resolvable:$true] %s131
          %137 = dma.hbm_to_vmem [thread:$0]  %s1, 512, %s132, [#allocation6], 128, 128, 8
        $region16: #{tpu_custom_call.1} parent=11 // pred_fallthru
          _
        // Predicated region
        $region17: #{tpu_custom_call.1} parent=11 // pred_check
          %p138 = pneg %p84
        $region18: #{tpu_custom_call.1} parent=11 // pred_check_branch
          %140 = sbr.rel (%p138) target = $region20
        $region19: #{tpu_custom_call.1} parent=11 // pred_region
          _
        $region20: #{tpu_custom_call.1} parent=11 // pred_fallthru
          _
      $region12: #{tpu_custom_call.1} parent=5 // pred_fallthru
        _
      %p141 = scmp.lt.s32.totalorder %s16, 2
      // Predicated region
      $region21: #{tpu_custom_call.1} parent=5 // pred_check
        %p142 = pneg %p141
      $region22: #{tpu_custom_call.1} parent=5 // pred_check_branch
        %144 = sbr.rel (%p142) target = $region24
      $region23: #{tpu_custom_call.1} parent=5 // pred_region
        // Predicated region
        $region25: #{tpu_custom_call.1} parent=23 // pred_check
          %p145 = pneg %p36
        $region26: #{tpu_custom_call.1} parent=23 // pred_check_branch
          %147 = sbr.rel (%p145) target = $region28
        $region27: #{tpu_custom_call.1} parent=23 // pred_region
          %s148 = sand.u32 %s26, 1
          %s149 = scalar_lea.sflag [#allocation3], %s148
          %s150 = sand.u32 %s26, 1
          %s151 = smul.addr %s150, 8
          %s152 = scalar_lea.vmem [#allocation2], %s151
          %s154 = ssub.s32 128, 128
          %155 = vsyncadd %s149, %s154
          %s156 = smul.addr %s16, 128
          %s157 = scalar_lea.hbm %s0, %s156
          %s159 = sshll.u32 %s152, 4
          %s160 = int_to_ptr.vmem [resolvable:$true] %s159
          %162 = dma.hbm_to_vmem [thread:$0]  %s157, 128, %s160, %s149
        $region28: #{tpu_custom_call.1} parent=23 // pred_fallthru
          _
      $region24: #{tpu_custom_call.1} parent=5 // pred_fallthru
        _
      %p163 = scmp.le.s32.totalorder 1, %s16
      %p164 = scmp.lt.s32.totalorder %s16, 3
      %p165 = pnand %p163, %p164
      %p166 = pneg %p165
      // Predicated region
      $region29: #{tpu_custom_call.1} parent=5 // pred_check
        _
      $region30: #{tpu_custom_call.1} parent=5 // pred_check_branch
        %168 = sbr.rel (%p165) target = $region32
      $region31: #{tpu_custom_call.1} parent=5 // pred_region
        %s169 = ssub.s32 %s16, 1
        %s170 = sand.u32 %s29, 1
        %s171 = scalar_lea.sflag [#allocation3], %s170
        %s172 = sand.u32 %s29, 1
        %s173 = smul.addr %s172, 8
        %s174 = scalar_lea.vmem [#allocation2], %s173
        // Predicated region
        $region33: #{tpu_custom_call.1} parent=31 // pred_check
          %p175 = pneg %p42
        $region34: #{tpu_custom_call.1} parent=31 // pred_check_branch
          %177 = sbr.rel (%p175) target = $region36
        $region35: #{tpu_custom_call.1} parent=31 // pred_region
          %178 = dma.done %s171, 128
        $region36: #{tpu_custom_call.1} parent=31 // pred_fallthru
          _
        // Predicated region
        $region37: #{tpu_custom_call.1} parent=31 // pred_check
          %p179 = pneg %p63
        $region38: #{tpu_custom_call.1} parent=31 // pred_check_branch
          %181 = sbr.rel (%p179) target = $region40
        $region39: #{tpu_custom_call.1} parent=31 // pred_region
          %182 = dma.done [#allocation6], 512
        $region40: #{tpu_custom_call.1} parent=31 // pred_fallthru
          _
        %s183 = sand.u32 %s29, 1
        %s184 = scalar_lea.sflag [#allocation3], %s183
        %s185 = sand.u32 %s29, 1
        %s186 = smul.addr %s185, 8
        %s187 = scalar_lea.vmem [#allocation2], %s186
        %p188 = pneg %p42
        %p189 = pneg %p39
        %p190 = pneg %p63
        %p191 = pneg %p60
        %p192 = pneg %p84
        %p193 = pneg %p81
        %p194 = pneg %p110
        %p195 = pneg %p107
        %s196 = sand.u32 %s97, 1
        %s197 = scalar_lea.sflag [#allocation4], %s196
        %s198 = sand.u32 %s97, 1
        %s199 = smul.addr %s198, 8
        %s200 = scalar_lea.vmem [#allocation7], %s199
        %v201 = vld [vmem:[%s174] sm:$0xff]
        %vm202 = vcmask 261120
        %v203 = vsel %vm202, %v201, 0.0
        %204 = vadd.xlane.f32.xlu0 %v203
        %v205 = vpop.xlane.xlu0 %204
        %v206 = vrcp.pop 32.0
        %v207 = vmul.f32 %v205, %v206
        %v208 = vmul.f32 %v201, %v201
        %v209 = vsel %vm202, %v208, 0.0
        %210 = vadd.xlane.f32.xlu0 %v209
        %v211 = vpop.xlane.xlu0 %210
        %v212 = vmul.f32 %v211, %v206
        %v213 = vmul.f32 %v207, %v207
        %v214 = vsub.f32 %v212, %v213
        %v215 = vmax.f32 %v214, 0.0
        %v216 = vadd.f32 %v215, 1e-05
        %v217 = vrsqrt.pop %v216
        %v218 = vsub.f32 %v201, %v207
        %v219 = vmul.f32 %v218, %v217
        %v220 = vld [vmem:[#allocation5] sm:$0xff]
        %v221 = vld [vmem:[#allocation5 + $0x8] sm:$0xff]
        %v222 = vld [vmem:[#allocation5 + $0x10] sm:$0xff]
        %v223 = vld [vmem:[#allocation5 + $0x18] sm:$0xff]
        %v224 = vld [vmem:[%s2] sm:$0x1]
        %v226 = vlaneseq
        %v227 = vshrl.u32 %v226, 7
        %v228 = vsub.s32 0, %v227
        %v229 = vrot.slane %v224, %v228
        %v232 = vsel %vm202, %v219, 0
        %234 = vmatprep.subr.mxu0 0.0
        %235 = vmatpush1.msra.mxu0 0.0
        %236 = vmatprep.subr.mxu0 0.0
        %237 = vmatpush1.msra.mxu0 0.0
        %238 = vmatprep.subr.mxu0 0.0
        %239 = vmatpush1.msra.mxu0 0.0
        %240 = vmatprep.subr.mxu0 0.0
        %241 = vmatpush1.msra.mxu0 0.0
        %242 = vmatprep.subr.mxu0 0.0
        %243 = vmatpush1.msra.mxu0 0.0
        %244 = vmatprep.subr.mxu0 0.0
        %245 = vmatpush1.msra.mxu0 0.0
        %246 = vmatprep.subr.mxu0 0.0
        %247 = vmatpush1.msra.mxu0 0.0
        %248 = vmatprep.subr.mxu0 0.0
        %249 = vmatpush1.msra.mxu0 0.0
        %250 = vmatprep.subr.mxu0 0.0
        %251 = vmatpush1.msra.mxu0 0.0
        %252 = vmatprep.subr.mxu0 0.0
        %253 = vmatpush1.msra.mxu0 0.0
        %254 = vmatprep.subr.mxu0 0.0
        %255 = vmatpush1.msra.mxu0 0.0
        %256 = vmatprep.subr.mxu0 0.0
        %257 = vmatpush1.msra.mxu0 0.0
        %258 = vmatprep.subr.mxu0 0.0
        %259 = vmatpush1.msra.mxu0 %v223
        %260 = vmatprep.subr.mxu0 0.0
        %261 = vmatpush1.msra.mxu0 %v222
        %262 = vmatprep.subr.mxu0 0.0
        %263 = vmatpush1.msra.mxu0 %v221
        %264 = vmatprep.subr.mxu0 0.0
        %265 = vmatpush1.msra.mxu0 %v220
        %266 = vmatprep.subr.mxu0 0.0
        %267 = vmatpush2.msra.mxu0 0.0
        %268 = vmatprep.subr.mxu0 0.0
        %269 = vmatpush2.msra.mxu0 0.0
        %270 = vmatprep.subr.mxu0 0.0
        %271 = vmatpush2.msra.mxu0 0.0
        %272 = vmatprep.subr.mxu0 0.0
        %273 = vmatpush2.msra.mxu0 0.0
        %274 = vmatprep.subr.mxu0 0.0
        %275 = vmatpush2.msra.mxu0 0.0
        %276 = vmatprep.subr.mxu0 0.0
        %277 = vmatpush2.msra.mxu0 0.0
        %278 = vmatprep.subr.mxu0 0.0
        %279 = vmatpush2.msra.mxu0 0.0
        %280 = vmatprep.subr.mxu0 0.0
        %281 = vmatpush2.msra.mxu0 0.0
        %282 = vmatprep.subr.mxu0 0.0
        %283 = vmatpush2.msra.mxu0 0.0
        %284 = vmatprep.subr.mxu0 0.0
        %285 = vmatpush2.msra.mxu0 0.0
        %286 = vmatprep.subr.mxu0 0.0
        %287 = vmatpush2.msra.mxu0 0.0
        %288 = vmatprep.subr.mxu0 0.0
        %289 = vmatpush2.msra.mxu0 0.0
        %290 = vmatprep.subr.mxu0 0.0
        %291 = vmatpush2.msra.mxu0 0.0
        %292 = vmatprep.subr.mxu0 0.0
        %293 = vmatpush2.msra.mxu0 0.0
        %294 = vmatprep.subr.mxu0 0.0
        %295 = vmatpush2.msra.mxu0 0.0
        %296 = vmatprep.subr.mxu0 0.0
        %297 = vmatpush2.msra.mxu0 0.0
        %298 = vmatprep.mubr.f32.mxu0 0.0
        %299 = vmatmul.mubr.f32.gmra.mxu0 %v232
        %v300 = vpop.f32.mrf.mxu0
        %v301 = vadd.f32 %v229, %v300
        %v302 = vpop.f32.mrf.mxu0
        %303 = vdwg.mxu0
        %304 = vst [vmem:[%s200] sm:$0xff] %v301
        %s305 = sand.u32 %s97, 1
        %s306 = scalar_lea.sflag [#allocation4], %s305
        %s307 = sand.u32 %s97, 1
        %s308 = smul.addr %s307, 8
        %s309 = scalar_lea.vmem [#allocation7], %s308
        // Predicated region
        $region41: #{tpu_custom_call.1} parent=31 // pred_check
          %p310 = pneg %p107
        $region42: #{tpu_custom_call.1} parent=31 // pred_check_branch
          %312 = sbr.rel (%p310) target = $region44
        $region43: #{tpu_custom_call.1} parent=31 // pred_region
          %s314 = ssub.s32 128, 128
          %315 = vsyncadd %s306, %s314
          %s316 = smul.addr %s21, 128
          %s317 = scalar_lea.hbm %s3, %s316
          %s319 = sshll.u32 %s309, 4
          %s320 = int_to_ptr.vmem [resolvable:$true] %s319
          %322 = dma.vmem_to_hbm [thread:$0]  %s320, 128, %s317, %s306
        $region44: #{tpu_custom_call.1} parent=31 // pred_fallthru
          _
      $region32: #{tpu_custom_call.1} parent=5 // pred_fallthru
        _
      %p323 = scmp.le.s32.totalorder 2, %s16
      // Predicated region
      $region45: #{tpu_custom_call.1} parent=5 // pred_check
        %p324 = pneg %p323
      $region46: #{tpu_custom_call.1} parent=5 // pred_check_branch
        %326 = sbr.rel (%p324) target = $region48
      $region47: #{tpu_custom_call.1} parent=5 // pred_region
        %s327 = ssub.s32 %s16, 2
        // Predicated region
        $region49: #{tpu_custom_call.1} parent=47 // pred_check
          %p328 = pneg %p113
        $region50: #{tpu_custom_call.1} parent=47 // pred_check_branch
          %330 = sbr.rel (%p328) target = $region52
        $region51: #{tpu_custom_call.1} parent=47 // pred_region
          %s331 = sand.u32 %s98, 1
          %s332 = scalar_lea.sflag [#allocation4], %s331
          %s333 = sand.u32 %s98, 1
          %s334 = smul.addr %s333, 8
          %s335 = scalar_lea.vmem [#allocation7], %s334
          %336 = dma.done %s332, 128
        $region52: #{tpu_custom_call.1} parent=47 // pred_fallthru
          _
      $region48: #{tpu_custom_call.1} parent=5 // pred_fallthru
        _
    $region6: #{tpu_custom_call.1} parent=1 // loop_footer
      %s20 = sadd.s32 1, %s16
    $region7: #{tpu_custom_call.1} parent=1 // loop_footer_branch
      %15 = sbr.rel target = $region3
    $region8: #{tpu_custom_call.1} parent=1 // loop_exit
      _
    %337 = vsyncpa [#allocation3], 1
    %s338 = scalar_lea.sflag [#allocation3], 1
    %339 = vsyncpa %s338, 1
    %340 = vsyncpa [#allocation6], 1
    %341 = vsyncpa [#allocation4], 1
    %s342 = scalar_lea.sflag [#allocation4], 1
    %343 = vsyncpa %s342, 1

</llo_original>
